<compile_context>
chip_gen: v6e
topology: v6e:2x2x1
jax: 0.10.0
libtpu: 0.0.40
codegen_flags: <defaults>
</compile_context>

<pallas_src>
import math

import jax
import jax.numpy as jnp
from jax.experimental import pallas as pl
from jax.experimental.pallas import tpu as pltpu


def _softmax_kernel(x_ref, o_ref):
    x = x_ref[...].astype(jnp.float32)
    m = jnp.max(x, axis=-1, keepdims=True)
    e = jnp.exp(x - m)                      # EUP
    s = jnp.sum(e, axis=-1, keepdims=True)  # XLU cross-lane reduce
    o_ref[...] = (e / s).astype(o_ref.dtype)


def _legacy_softmax_dim(ndim):
    # Matches torch.nn.functional._get_softmax_dim behavior for dim=None.
    return 0 if ndim in (0, 1, 3) else 1


def softmax(x, dim=None, *, target_block_bytes=2 * 1024 * 1024):
    """Softmax along `dim` (PyTorch nn.Softmax semantics, incl. dim=None legacy default)."""
    if dim is None:
        dim = _legacy_softmax_dim(x.ndim)
    dim = dim % x.ndim

    orig_dtype = x.dtype

    # Move the softmax axis to the last (lane) dim, flatten the rest into rows.
    xm = jnp.moveaxis(x, dim, -1)
    moved_shape = xm.shape
    C = moved_shape[-1]
    R = max(1, math.prod(moved_shape[:-1]))
    x2 = xm.reshape(R, C)

    if R <= 8:
        # Single block covering the whole array (block dims == full array dims).
        tile_rows = R
        r_pad = R
    else:
        # Size blocks to ~target_block_bytes of f32 work; keep tile_rows a
        # multiple of 8 so the (8, 128) sublane constraint is satisfied.
        bytes_per_row = C * 4
        max_rows = max(8, (target_block_bytes // bytes_per_row) // 8 * 8)
        r8 = pl.cdiv(R, 8) * 8
        tile_rows = min(max_rows, r8)
        # v7x megacore: prefer >= 2 grid steps so the "parallel" row axis can
        # shard across both TensorCores.
        if tile_rows >= r8 and r8 >= 16:
            tile_rows = max(8, (r8 // 2) // 8 * 8)
        # Pad rows up to a multiple of tile_rows (avoids degenerate tiny tiles).
        r_pad = pl.cdiv(r8, tile_rows) * tile_rows

    if r_pad != R:
        # Padded rows are independent (softmax of zeros is finite) and sliced off below.
        x2 = jnp.pad(x2, ((0, r_pad - R), (0, 0)))

    grid = (r_pad // tile_rows,)

    out = pl.pallas_call(
        _softmax_kernel,
        out_shape=jax.ShapeDtypeStruct((r_pad, C), orig_dtype),
        grid=grid,
        in_specs=[pl.BlockSpec((tile_rows, C), lambda i: (i, 0))],
        out_specs=pl.BlockSpec((tile_rows, C), lambda i: (i, 0)),
        compiler_params=pltpu.CompilerParams(
            dimension_semantics=("parallel",),
        ),
    )(x2)

    if r_pad != R:
        out = out[:R]
    # TODO(synk): for very large C (block of 8 rows exceeds VMEM) an online
    # two-pass / streaming softmax over column blocks would be needed.
    return jnp.moveaxis(out.reshape(moved_shape), -1, dim)


if __name__ == "__main__":
    key = jax.random.PRNGKey(0)
    x = jax.random.normal(key, (2, 4, 16, 16), dtype=jnp.float32)

    # dim=None -> legacy PyTorch default (dim=1 for 4-D input).
    y_default = softmax(x)
    jax.block_until_ready(y_default)
    ref_default = jax.nn.softmax(x, axis=1)
    assert y_default.shape == x.shape and y_default.dtype == x.dtype
    assert jnp.allclose(y_default, ref_default, atol=1e-6, rtol=1e-6)

    # Explicit last-dim softmax.
    y_last = softmax(x, dim=-1)
    jax.block_until_ready(y_last)
    ref_last = jax.nn.softmax(x, axis=-1)
    assert jnp.allclose(y_last, ref_last, atol=1e-6, rtol=1e-6)

    # Ragged shape (exercises the row-padding path).
    x3 = jax.random.normal(jax.random.PRNGKey(1), (3, 5, 7), dtype=jnp.float32)
    y3 = softmax(x3, dim=-1)
    jax.block_until_ready(y3)
    assert jnp.allclose(y3, jax.nn.softmax(x3, axis=-1), atol=1e-6, rtol=1e-6)

    print("KERNEL_OK")
</pallas_src>

<mosaic_0001>
module attributes {stable_mosaic.version = 11 : i64} {
  func.func @_softmax_kernel(%arg0: i32, %arg1: memref<256x4xf32, #tpu.memory_space<vmem>>, %arg2: memref<256x4xf32, #tpu.memory_space<vmem>>) attributes {dimension_semantics = [#tpu.dimension_semantics<parallel>], iteration_bounds = array<i64: 2>, scalar_prefetch = 0 : i64, scratch_operands = 0 : i64, tpu.core_type = #tpu.core_type<tc>, window_params = [{transform_indices = @transform_0, window_bounds = array<i64: 256, 4>}, {transform_indices = @transform_1, window_bounds = array<i64: 256, 4>}]} {
    %c0 = arith.constant 0 : index
    %c0_0 = arith.constant 0 : index
    %0 = vector.load %arg1[%c0, %c0_0] : memref<256x4xf32, #tpu.memory_space<vmem>>, vector<256x4xf32>
    %cst = arith.constant dense<0xFF800000> : vector<256xf32>
    %1 = vector.multi_reduction <maximumf>, %0, %cst [1] : vector<256x4xf32> to vector<256xf32>
    %2 = vector.shape_cast %1 : vector<256xf32> to vector<256x1xf32>
    %3 = vector.broadcast %2 : vector<256x1xf32> to vector<256x4xf32>
    %4 = arith.subf %0, %3 : vector<256x4xf32>
    %5 = math.exp %4 : vector<256x4xf32>
    %cst_1 = arith.constant dense<0.000000e+00> : vector<256xf32>
    %6 = vector.multi_reduction <add>, %5, %cst_1 [1] : vector<256x4xf32> to vector<256xf32>
    %7 = vector.shape_cast %6 : vector<256xf32> to vector<256x1xf32>
    %8 = vector.broadcast %7 : vector<256x1xf32> to vector<256x4xf32>
    %9 = arith.divf %5, %8 : vector<256x4xf32>
    %c0_2 = arith.constant 0 : index
    %c0_3 = arith.constant 0 : index
    %10 = vector.load %arg2[%c0_2, %c0_3] : memref<256x4xf32, #tpu.memory_space<vmem>>, vector<256x4xf32>
    tpu.vector_store %arg2[%c0_2, %c0_3], %9 {strides = array<i32>} : memref<256x4xf32, #tpu.memory_space<vmem>>, vector<256x4xf32>,
    return
  }
  func.func @transform_0(%arg0: i32) -> (i32, i32) {
    %c0_i32 = arith.constant 0 : i32
    %c0_i32_0 = arith.constant 0 : i32
    return %arg0, %c0_i32 : i32, i32
  }
  func.func @transform_1(%arg0: i32) -> (i32, i32) {
    %c0_i32 = arith.constant 0 : i32
    %c0_i32_0 = arith.constant 0 : i32
    return %arg0, %c0_i32 : i32, i32
  }
}

</mosaic_0001>

<llo_original>
// kernel: tpu_custom_call.1
$region0: #{tpu_custom_call.1}
  #allocation0 [shape = 'u32[]', space=smem, size = 0x4, offset = 0x4, fixed_abs, tag = 'smem constant byte address 0x4 - core index']
  #allocation1 [shape = 'u32[144,128]{1,0:T(1,128)}', space=vmem, size = 0x12000, scoped, tag = 'internal scratch']
  %s0 = inlined_call_operand.vmem [shape: f32[512,4], index: 0, kind: input, shape index: {}]
  %s1 = inlined_call_operand.vmem [shape: f32[512,4], index: 1, kind: output, shape index: {}]
  %s2 = sld [smem:[#allocation0]]
  $region37: #{tpu_custom_call.1} parent=0
    _
  %s4 = ssub.s32 1, %s2
  %s5 = scalar_select 0, %s4, %s2
  loop: start=0, step=1, limit=4
  $region2: #{tpu_custom_call.1} parent=0 // loop_pre_header
    _
  $region3: #{tpu_custom_call.1} parent=0 // loop_header
    %s7 = sphi 0, %s11
    %p8 = scmp.ge.s32.totalorder %s7, 4
    %s17 = sphi 0, %s19
    %s20 = sphi 0, %s17
    %s21 = sphi 0, %s20
    %s37 = sphi 0, %s21
    %s43 = sphi 0, %s45
    %s46 = sphi 0, %s43
    %s47 = sphi 0, %s46
    %s63 = sphi 0, %s47
  $region4: #{tpu_custom_call.1} parent=0 // loop_header_branch
    %10 = sbr.rel (%p8) target = $region8
  $region5: #{tpu_custom_call.1} parent=0 // loop_body
    %s12 = ssub.s32 %s7, 1
    %s13 = ssub.s32 %s7, 2
    %s14 = sadd.s32 %s7, 1
    %s15 = ssub.s32 %s7, %s14
    %p16 = scmp.eq.s32.totalorder %s15, 0
    %s18 = sadd.s32 %s17, 1
    %s19 = scalar_select %p16, %s17, %s18
    %p22 = pneg %p16
    %p23 = scmp.eq.s32.totalorder %s7, 1
    %p24 = por %p22, %p23
    %p25 = scmp.ne.s32.totalorder %s17, %s20
    %p26 = scmp.eq.s32.totalorder %s7, 0
    %p27 = por %p25, %p26
    %p28 = scmp.ne.s32.totalorder %s17, %s20
    %p29 = scmp.eq.s32.totalorder %s12, 1
    %p30 = por %p28, %p29
    %p31 = scmp.ne.s32.totalorder %s20, %s21
    %p32 = scmp.eq.s32.totalorder %s12, 0
    %p33 = por %p31, %p32
    %p34 = scmp.ne.s32.totalorder %s20, %s21
    %p35 = scmp.eq.s32.totalorder %s13, 1
    %p36 = por %p34, %p35
    %p38 = scmp.ne.s32.totalorder %s21, %s37
    %p39 = scmp.eq.s32.totalorder %s13, 0
    %p40 = por %p38, %p39
    %s41 = ssub.s32 %s7, %s14
    %p42 = scmp.eq.s32.totalorder %s41, 0
    %s44 = sadd.s32 %s43, 1
    %s45 = scalar_select %p42, %s43, %s44
    %p48 = pneg %p42
    %p49 = scmp.eq.s32.totalorder %s7, 1
    %p50 = por %p48, %p49
    %p51 = scmp.ne.s32.totalorder %s43, %s46
    %p52 = scmp.eq.s32.totalorder %s7, 0
    %p53 = por %p51, %p52
    %p54 = scmp.ne.s32.totalorder %s43, %s46
    %p55 = scmp.eq.s32.totalorder %s12, 1
    %p56 = por %p54, %p55
    %p57 = scmp.ne.s32.totalorder %s46, %s47
    %p58 = scmp.eq.s32.totalorder %s12, 0
    %p59 = por %p57, %p58
    %p60 = scmp.ne.s32.totalorder %s46, %s47
    %p61 = scmp.eq.s32.totalorder %s13, 1
    %p62 = por %p60, %p61
    %p64 = scmp.ne.s32.totalorder %s47, %s63
    %p65 = scmp.eq.s32.totalorder %s13, 0
    %p66 = por %p64, %p65
    %p67 = scmp.le.s32.totalorder 1, %s7
    %p68 = scmp.lt.s32.totalorder %s7, 3
    %p69 = pnand %p67, %p68
    %p70 = pneg %p69
    // Predicated region
    $region9: #{tpu_custom_call.1} parent=5 // pred_check
      _
    $region10: #{tpu_custom_call.1} parent=5 // pred_check_branch
      %72 = sbr.rel (%p69) target = $region12
    $region11: #{tpu_custom_call.1} parent=5 // pred_region
      %s73 = ssub.s32 %s7, 1
    $region12: #{tpu_custom_call.1} parent=5 // pred_fallthru
      _
    %p74 = scmp.lt.s32.totalorder %s7, 2
    // Predicated region
    $region13: #{tpu_custom_call.1} parent=5 // pred_check
      %p75 = pneg %p74
    $region14: #{tpu_custom_call.1} parent=5 // pred_check_branch
      %77 = sbr.rel (%p75) target = $region16
    $region15: #{tpu_custom_call.1} parent=5 // pred_region
      // Predicated region
      $region17: #{tpu_custom_call.1} parent=15 // pred_check
        %p78 = pneg %p27
      $region18: #{tpu_custom_call.1} parent=15 // pred_check_branch
        %80 = sbr.rel (%p78) target = $region20
      $region19: #{tpu_custom_call.1} parent=15 // pred_region
        %s81 = smul.u32 32, %s7
        %p82 = scmp.lt.s32.totalorder %s81, 63
        %s83 = scalar_select %p82, %s81, 63
        %s84 = smul.addr %s83, 8
        %s85 = scalar_lea.vmem %s0, %s84
        %s86 = smul.u32 32, %s7
      $region20: #{tpu_custom_call.1} parent=15 // pred_fallthru
        _
    $region16: #{tpu_custom_call.1} parent=5 // pred_fallthru
      _
    %p87 = scmp.le.s32.totalorder 1, %s7
    %p88 = scmp.lt.s32.totalorder %s7, 3
    %p89 = pnand %p87, %p88
    %p90 = pneg %p89
    // Predicated region
    $region21: #{tpu_custom_call.1} parent=5 // pred_check
      _
    $region22: #{tpu_custom_call.1} parent=5 // pred_check_branch
      %92 = sbr.rel (%p89) target = $region24
    $region23: #{tpu_custom_call.1} parent=5 // pred_region
      %s93 = ssub.s32 %s7, 1
      %s94 = smul.u32 32, %s12
      %p95 = scmp.lt.s32.totalorder %s94, 63
      %s96 = scalar_select %p95, %s94, 63
      %s97 = smul.addr %s96, 8
      %s98 = scalar_lea.vmem %s0, %s97
      %p99 = pneg %p33
      %p100 = pneg %p30
      %p101 = pneg %p59
      %p102 = pneg %p56
      %s103 = smul.u32 32, %s12
      %p104 = scmp.lt.s32.totalorder %s103, 63
      %s105 = scalar_select %p104, %s103, 63
      %s106 = smul.addr %s105, 8
      %s107 = scalar_lea.vmem %s1, %s106
      %s108 = smul.u32 32, %s12
      %p109 = scmp.lt.s32.totalorder %s108, 63
      %s110 = scalar_select %p109, %s108, 63
      %s111 = smul.addr %s110, 8
      %s112 = scalar_lea.vmem %s0, %s111
      %s113 = smul.u32 32, %s12
      %s114 = smul.u32 32, %s12
      %p115 = scmp.lt.s32.totalorder %s114, 63
      %s116 = scalar_select %p115, %s114, 63
      %s117 = smul.addr %s116, 8
      %s118 = scalar_lea.vmem %s1, %s117
      %s119 = smul.u32 32, %s12
      %v120 = vld [vmem:[%s112] sm:$0xff]
      %v121 = vld [vmem:[%s112 + $0x8] sm:$0xff]
      %v122 = vld [vmem:[%s112 + $0x10] sm:$0xff]
      %v123 = vld [vmem:[%s112 + $0x18] sm:$0xff]
      %v124 = vld [vmem:[%s112 + $0x20] sm:$0xff]
      %v125 = vld [vmem:[%s112 + $0x28] sm:$0xff]
      %v126 = vld [vmem:[%s112 + $0x30] sm:$0xff]
      %v127 = vld [vmem:[%s112 + $0x38] sm:$0xff]
      %v128 = vld [vmem:[%s112 + $0x40] sm:$0xff]
      %v129 = vld [vmem:[%s112 + $0x48] sm:$0xff]
      %v130 = vld [vmem:[%s112 + $0x50] sm:$0xff]
      %v131 = vld [vmem:[%s112 + $0x58] sm:$0xff]
      %v132 = vld [vmem:[%s112 + $0x60] sm:$0xff]
      %v133 = vld [vmem:[%s112 + $0x68] sm:$0xff]
      %v134 = vld [vmem:[%s112 + $0x70] sm:$0xff]
      %v135 = vld [vmem:[%s112 + $0x78] sm:$0xff]
      %v136 = vld [vmem:[%s112 + $0x80] sm:$0xff]
      %v137 = vld [vmem:[%s112 + $0x88] sm:$0xff]
      %v138 = vld [vmem:[%s112 + $0x90] sm:$0xff]
      %v139 = vld [vmem:[%s112 + $0x98] sm:$0xff]
      %v140 = vld [vmem:[%s112 + $0xa0] sm:$0xff]
      %v141 = vld [vmem:[%s112 + $0xa8] sm:$0xff]
      %v142 = vld [vmem:[%s112 + $0xb0] sm:$0xff]
      %v143 = vld [vmem:[%s112 + $0xb8] sm:$0xff]
      %v144 = vld [vmem:[%s112 + $0xc0] sm:$0xff]
      %v145 = vld [vmem:[%s112 + $0xc8] sm:$0xff]
      %v146 = vld [vmem:[%s112 + $0xd0] sm:$0xff]
      %v147 = vld [vmem:[%s112 + $0xd8] sm:$0xff]
      %v148 = vld [vmem:[%s112 + $0xe0] sm:$0xff]
      %v149 = vld [vmem:[%s112 + $0xe8] sm:$0xff]
      %v150 = vld [vmem:[%s112 + $0xf0] sm:$0xff]
      %v151 = vld [vmem:[%s112 + $0xf8] sm:$0xff]
      %vm152 = vcmask 31744
      %v153 = vsel %vm152, %v120, -inf
      %154 = vmax.xlane.f32.xlu0 %v153
      %v155 = vpop.xlane.xlu0 %154
      %v156 = vsel %vm152, %v121, -inf
      %157 = vmax.xlane.f32.xlu0 %v156
      %v158 = vpop.xlane.xlu0 %157
      %v159 = vsel %vm152, %v122, -inf
      %160 = vmax.xlane.f32.xlu0 %v159
      %v161 = vpop.xlane.xlu0 %160
      %v162 = vsel %vm152, %v123, -inf
      %163 = vmax.xlane.f32.xlu0 %v162
      %v164 = vpop.xlane.xlu0 %163
      %v165 = vsel %vm152, %v124, -inf
      %166 = vmax.xlane.f32.xlu0 %v165
      %v167 = vpop.xlane.xlu0 %166
      %v168 = vsel %vm152, %v125, -inf
      %169 = vmax.xlane.f32.xlu0 %v168
      %v170 = vpop.xlane.xlu0 %169
      %v171 = vsel %vm152, %v126, -inf
      %172 = vmax.xlane.f32.xlu0 %v171
      %v173 = vpop.xlane.xlu0 %172
      %v174 = vsel %vm152, %v127, -inf
      %175 = vmax.xlane.f32.xlu0 %v174
      %v176 = vpop.xlane.xlu0 %175
      %v177 = vsel %vm152, %v128, -inf
      %178 = vmax.xlane.f32.xlu0 %v177
      %v179 = vpop.xlane.xlu0 %178
      %v180 = vsel %vm152, %v129, -inf
      %181 = vmax.xlane.f32.xlu0 %v180
      %v182 = vpop.xlane.xlu0 %181
      %v183 = vsel %vm152, %v130, -inf
      %184 = vmax.xlane.f32.xlu0 %v183
      %v185 = vpop.xlane.xlu0 %184
      %v186 = vsel %vm152, %v131, -inf
      %187 = vmax.xlane.f32.xlu0 %v186
      %v188 = vpop.xlane.xlu0 %187
      %v189 = vsel %vm152, %v132, -inf
      %190 = vmax.xlane.f32.xlu0 %v189
      %v191 = vpop.xlane.xlu0 %190
      %v192 = vsel %vm152, %v133, -inf
      %193 = vmax.xlane.f32.xlu0 %v192
      %v194 = vpop.xlane.xlu0 %193
      %v195 = vsel %vm152, %v134, -inf
      %196 = vmax.xlane.f32.xlu0 %v195
      %v197 = vpop.xlane.xlu0 %196
      %v198 = vsel %vm152, %v135, -inf
      %199 = vmax.xlane.f32.xlu0 %v198
      %v200 = vpop.xlane.xlu0 %199
      %v201 = vsel %vm152, %v136, -inf
      %202 = vmax.xlane.f32.xlu0 %v201
      %v203 = vpop.xlane.xlu0 %202
      %v204 = vsel %vm152, %v137, -inf
      %205 = vmax.xlane.f32.xlu0 %v204
      %v206 = vpop.xlane.xlu0 %205
      %v207 = vsel %vm152, %v138, -inf
      %208 = vmax.xlane.f32.xlu0 %v207
      %v209 = vpop.xlane.xlu0 %208
      %v210 = vsel %vm152, %v139, -inf
      %211 = vmax.xlane.f32.xlu0 %v210
      %v212 = vpop.xlane.xlu0 %211
      %v213 = vsel %vm152, %v140, -inf
      %214 = vmax.xlane.f32.xlu0 %v213
      %v215 = vpop.xlane.xlu0 %214
      %v216 = vsel %vm152, %v141, -inf
      %217 = vmax.xlane.f32.xlu0 %v216
      %v218 = vpop.xlane.xlu0 %217
      %v219 = vsel %vm152, %v142, -inf
      %220 = vmax.xlane.f32.xlu0 %v219
      %v221 = vpop.xlane.xlu0 %220
      %v222 = vsel %vm152, %v143, -inf
      %223 = vmax.xlane.f32.xlu0 %v222
      %v224 = vpop.xlane.xlu0 %223
      %v225 = vsel %vm152, %v144, -inf
      %226 = vmax.xlane.f32.xlu0 %v225
      %v227 = vpop.xlane.xlu0 %226
      %v228 = vsel %vm152, %v145, -inf
      %229 = vmax.xlane.f32.xlu0 %v228
      %v230 = vpop.xlane.xlu0 %229
      %v231 = vsel %vm152, %v146, -inf
      %232 = vmax.xlane.f32.xlu0 %v231
      %v233 = vpop.xlane.xlu0 %232
      %v234 = vsel %vm152, %v147, -inf
      %235 = vmax.xlane.f32.xlu0 %v234
      %v236 = vpop.xlane.xlu0 %235
      %v237 = vsel %vm152, %v148, -inf
      %238 = vmax.xlane.f32.xlu0 %v237
      %v239 = vpop.xlane.xlu0 %238
      %v240 = vsel %vm152, %v149, -inf
      %241 = vmax.xlane.f32.xlu0 %v240
      %v242 = vpop.xlane.xlu0 %241
      %v243 = vsel %vm152, %v150, -inf
      %244 = vmax.xlane.f32.xlu0 %v243
      %v245 = vpop.xlane.xlu0 %244
      %v246 = vsel %vm152, %v151, -inf
      %247 = vmax.xlane.f32.xlu0 %v246
      %v248 = vpop.xlane.xlu0 %247
      %v249 = vsub.f32 %v120, %v155
      %v250 = vsub.f32 %v121, %v158
      %v251 = vsub.f32 %v122, %v161
      %v252 = vsub.f32 %v123, %v164
      %v253 = vsub.f32 %v124, %v167
      %v254 = vsub.f32 %v125, %v170
      %v255 = vsub.f32 %v126, %v173
      %v256 = vsub.f32 %v127, %v176
      %v257 = vsub.f32 %v128, %v179
      %v258 = vsub.f32 %v129, %v182
      %v259 = vsub.f32 %v130, %v185
      %v260 = vsub.f32 %v131, %v188
      %v261 = vsub.f32 %v132, %v191
      %v262 = vsub.f32 %v133, %v194
      %v263 = vsub.f32 %v134, %v197
      %v264 = vsub.f32 %v135, %v200
      %v265 = vsub.f32 %v136, %v203
      %v266 = vsub.f32 %v137, %v206
      %v267 = vsub.f32 %v138, %v209
      %v268 = vsub.f32 %v139, %v212
      %v269 = vsub.f32 %v140, %v215
      %v270 = vsub.f32 %v141, %v218
      %v271 = vsub.f32 %v142, %v221
      %v272 = vsub.f32 %v143, %v224
      %v273 = vsub.f32 %v144, %v227
      %v274 = vsub.f32 %v145, %v230
      %v275 = vsub.f32 %v146, %v233
      %v276 = vsub.f32 %v147, %v236
      %v277 = vsub.f32 %v148, %v239
      %v278 = vsub.f32 %v149, %v242
      %v279 = vsub.f32 %v150, %v245
      %v280 = vsub.f32 %v151, %v248
      %v281 = vmul.f32 %v249, 1.442695
      %v282 = vpow.pop %v281
      %v283 = vmul.f32 %v250, 1.442695
      %v284 = vpow.pop %v283
      %v285 = vmul.f32 %v251, 1.442695
      %v286 = vpow.pop %v285
      %v287 = vmul.f32 %v252, 1.442695
      %v288 = vpow.pop %v287
      %v289 = vmul.f32 %v253, 1.442695
      %v290 = vpow.pop %v289
      %v291 = vmul.f32 %v254, 1.442695
      %v292 = vpow.pop %v291
      %v293 = vmul.f32 %v255, 1.442695
      %v294 = vpow.pop %v293
      %v295 = vmul.f32 %v256, 1.442695
      %v296 = vpow.pop %v295
      %v297 = vmul.f32 %v257, 1.442695
      %v298 = vpow.pop %v297
      %v299 = vmul.f32 %v258, 1.442695
      %v300 = vpow.pop %v299
      %v301 = vmul.f32 %v259, 1.442695
      %v302 = vpow.pop %v301
      %v303 = vmul.f32 %v260, 1.442695
      %v304 = vpow.pop %v303
      %v305 = vmul.f32 %v261, 1.442695
      %v306 = vpow.pop %v305
      %v307 = vmul.f32 %v262, 1.442695
      %v308 = vpow.pop %v307
      %v309 = vmul.f32 %v263, 1.442695
      %v310 = vpow.pop %v309
      %v311 = vmul.f32 %v264, 1.442695
      %v312 = vpow.pop %v311
      %v313 = vmul.f32 %v265, 1.442695
      %v314 = vpow.pop %v313
      %v315 = vmul.f32 %v266, 1.442695
      %v316 = vpow.pop %v315
      %v317 = vmul.f32 %v267, 1.442695
      %v318 = vpow.pop %v317
      %v319 = vmul.f32 %v268, 1.442695
      %v320 = vpow.pop %v319
      %v321 = vmul.f32 %v269, 1.442695
      %v322 = vpow.pop %v321
      %v323 = vmul.f32 %v270, 1.442695
      %v324 = vpow.pop %v323
      %v325 = vmul.f32 %v271, 1.442695
      %v326 = vpow.pop %v325
      %v327 = vmul.f32 %v272, 1.442695
      %v328 = vpow.pop %v327
      %v329 = vmul.f32 %v273, 1.442695
      %v330 = vpow.pop %v329
      %v331 = vmul.f32 %v274, 1.442695
      %v332 = vpow.pop %v331
      %v333 = vmul.f32 %v275, 1.442695
      %v334 = vpow.pop %v333
      %v335 = vmul.f32 %v276, 1.442695
      %v336 = vpow.pop %v335
      %v337 = vmul.f32 %v277, 1.442695
      %v338 = vpow.pop %v337
      %v339 = vmul.f32 %v278, 1.442695
      %v340 = vpow.pop %v339
      %v341 = vmul.f32 %v279, 1.442695
      %v342 = vpow.pop %v341
      %v343 = vmul.f32 %v280, 1.442695
      %v344 = vpow.pop %v343
      %v345 = vsel %vm152, %v282, 0.0
      %346 = vadd.xlane.f32.xlu0 %v345
      %v347 = vpop.xlane.xlu0 %346
      %v348 = vsel %vm152, %v284, 0.0
      %349 = vadd.xlane.f32.xlu0 %v348
      %v350 = vpop.xlane.xlu0 %349
      %v351 = vsel %vm152, %v286, 0.0
      %352 = vadd.xlane.f32.xlu0 %v351
      %v353 = vpop.xlane.xlu0 %352
      %v354 = vsel %vm152, %v288, 0.0
      %355 = vadd.xlane.f32.xlu0 %v354
      %v356 = vpop.xlane.xlu0 %355
      %v357 = vsel %vm152, %v290, 0.0
      %358 = vadd.xlane.f32.xlu0 %v357
      %v359 = vpop.xlane.xlu0 %358
      %v360 = vsel %vm152, %v292, 0.0
      %361 = vadd.xlane.f32.xlu0 %v360
      %v362 = vpop.xlane.xlu0 %361
      %v363 = vsel %vm152, %v294, 0.0
      %364 = vadd.xlane.f32.xlu0 %v363
      %v365 = vpop.xlane.xlu0 %364
      %v366 = vsel %vm152, %v296, 0.0
      %367 = vadd.xlane.f32.xlu0 %v366
      %v368 = vpop.xlane.xlu0 %367
      %v369 = vsel %vm152, %v298, 0.0
      %370 = vadd.xlane.f32.xlu0 %v369
      %v371 = vpop.xlane.xlu0 %370
      %v372 = vsel %vm152, %v300, 0.0
      %373 = vadd.xlane.f32.xlu0 %v372
      %v374 = vpop.xlane.xlu0 %373
      %v375 = vsel %vm152, %v302, 0.0
      %376 = vadd.xlane.f32.xlu0 %v375
      %v377 = vpop.xlane.xlu0 %376
      %v378 = vsel %vm152, %v304, 0.0
      %379 = vadd.xlane.f32.xlu0 %v378
      %v380 = vpop.xlane.xlu0 %379
      %v381 = vsel %vm152, %v306, 0.0
      %382 = vadd.xlane.f32.xlu0 %v381
      %v383 = vpop.xlane.xlu0 %382
      %v384 = vsel %vm152, %v308, 0.0
      %385 = vadd.xlane.f32.xlu0 %v384
      %v386 = vpop.xlane.xlu0 %385
      %v387 = vsel %vm152, %v310, 0.0
      %388 = vadd.xlane.f32.xlu0 %v387
      %v389 = vpop.xlane.xlu0 %388
      %v390 = vsel %vm152, %v312, 0.0
      %391 = vadd.xlane.f32.xlu0 %v390
      %v392 = vpop.xlane.xlu0 %391
      %v393 = vsel %vm152, %v314, 0.0
      %394 = vadd.xlane.f32.xlu0 %v393
      %v395 = vpop.xlane.xlu0 %394
      %v396 = vsel %vm152, %v316, 0.0
      %397 = vadd.xlane.f32.xlu0 %v396
      %v398 = vpop.xlane.xlu0 %397
      %v399 = vsel %vm152, %v318, 0.0
      %400 = vadd.xlane.f32.xlu0 %v399
      %v401 = vpop.xlane.xlu0 %400
      %v402 = vsel %vm152, %v320, 0.0
      %403 = vadd.xlane.f32.xlu0 %v402
      %v404 = vpop.xlane.xlu0 %403
      %v405 = vsel %vm152, %v322, 0.0
      %406 = vadd.xlane.f32.xlu0 %v405
      %v407 = vpop.xlane.xlu0 %406
      %v408 = vsel %vm152, %v324, 0.0
      %409 = vadd.xlane.f32.xlu0 %v408
      %v410 = vpop.xlane.xlu0 %409
      %v411 = vsel %vm152, %v326, 0.0
      %412 = vadd.xlane.f32.xlu0 %v411
      %v413 = vpop.xlane.xlu0 %412
      %v414 = vsel %vm152, %v328, 0.0
      %415 = vadd.xlane.f32.xlu0 %v414
      %v416 = vpop.xlane.xlu0 %415
      %v417 = vsel %vm152, %v330, 0.0
      %418 = vadd.xlane.f32.xlu0 %v417
      %v419 = vpop.xlane.xlu0 %418
      %v420 = vsel %vm152, %v332, 0.0
      %421 = vadd.xlane.f32.xlu0 %v420
      %v422 = vpop.xlane.xlu0 %421
      %v423 = vsel %vm152, %v334, 0.0
      %424 = vadd.xlane.f32.xlu0 %v423
      %v425 = vpop.xlane.xlu0 %424
      %v426 = vsel %vm152, %v336, 0.0
      %427 = vadd.xlane.f32.xlu0 %v426
      %v428 = vpop.xlane.xlu0 %427
      %v429 = vsel %vm152, %v338, 0.0
      %430 = vadd.xlane.f32.xlu0 %v429
      %v431 = vpop.xlane.xlu0 %430
      %v432 = vsel %vm152, %v340, 0.0
      %433 = vadd.xlane.f32.xlu0 %v432
      %v434 = vpop.xlane.xlu0 %433
      %v435 = vsel %vm152, %v342, 0.0
      %436 = vadd.xlane.f32.xlu0 %v435
      %v437 = vpop.xlane.xlu0 %436
      %v438 = vsel %vm152, %v344, 0.0
      %439 = vadd.xlane.f32.xlu0 %v438
      %v440 = vpop.xlane.xlu0 %439
      %v441 = vrcp.pop %v347
      %v442 = vmul.f32 %v282, %v441
      %v443 = vrcp.pop %v350
      %v444 = vmul.f32 %v284, %v443
      %v445 = vrcp.pop %v353
      %v446 = vmul.f32 %v286, %v445
      %v447 = vrcp.pop %v356
      %v448 = vmul.f32 %v288, %v447
      %v449 = vrcp.pop %v359
      %v450 = vmul.f32 %v290, %v449
      %v451 = vrcp.pop %v362
      %v452 = vmul.f32 %v292, %v451
      %v453 = vrcp.pop %v365
      %v454 = vmul.f32 %v294, %v453
      %v455 = vrcp.pop %v368
      %v456 = vmul.f32 %v296, %v455
      %v457 = vrcp.pop %v371
      %v458 = vmul.f32 %v298, %v457
      %v459 = vrcp.pop %v374
      %v460 = vmul.f32 %v300, %v459
      %v461 = vrcp.pop %v377
      %v462 = vmul.f32 %v302, %v461
      %v463 = vrcp.pop %v380
      %v464 = vmul.f32 %v304, %v463
      %v465 = vrcp.pop %v383
      %v466 = vmul.f32 %v306, %v465
      %v467 = vrcp.pop %v386
      %v468 = vmul.f32 %v308, %v467
      %v469 = vrcp.pop %v389
      %v470 = vmul.f32 %v310, %v469
      %v471 = vrcp.pop %v392
      %v472 = vmul.f32 %v312, %v471
      %v473 = vrcp.pop %v395
      %v474 = vmul.f32 %v314, %v473
      %v475 = vrcp.pop %v398
      %v476 = vmul.f32 %v316, %v475
      %v477 = vrcp.pop %v401
      %v478 = vmul.f32 %v318, %v477
      %v479 = vrcp.pop %v404
      %v480 = vmul.f32 %v320, %v479
      %v481 = vrcp.pop %v407
      %v482 = vmul.f32 %v322, %v481
      %v483 = vrcp.pop %v410
      %v484 = vmul.f32 %v324, %v483
      %v485 = vrcp.pop %v413
      %v486 = vmul.f32 %v326, %v485
      %v487 = vrcp.pop %v416
      %v488 = vmul.f32 %v328, %v487
      %v489 = vrcp.pop %v419
      %v490 = vmul.f32 %v330, %v489
      %v491 = vrcp.pop %v422
      %v492 = vmul.f32 %v332, %v491
      %v493 = vrcp.pop %v425
      %v494 = vmul.f32 %v334, %v493
      %v495 = vrcp.pop %v428
      %v496 = vmul.f32 %v336, %v495
      %v497 = vrcp.pop %v431
      %v498 = vmul.f32 %v338, %v497
      %v499 = vrcp.pop %v434
      %v500 = vmul.f32 %v340, %v499
      %v501 = vrcp.pop %v437
      %v502 = vmul.f32 %v342, %v501
      %v503 = vrcp.pop %v440
      %v504 = vmul.f32 %v344, %v503
      %505 = vst.msk [vmem:[%s118] sm:$0xff] %vm152, %v442
      %506 = vst.msk [vmem:[%s118 + $0x8] sm:$0xff] %vm152, %v444
      %507 = vst.msk [vmem:[%s118 + $0x10] sm:$0xff] %vm152, %v446
      %508 = vst.msk [vmem:[%s118 + $0x18] sm:$0xff] %vm152, %v448
      %509 = vst.msk [vmem:[%s118 + $0x20] sm:$0xff] %vm152, %v450
      %510 = vst.msk [vmem:[%s118 + $0x28] sm:$0xff] %vm152, %v452
      %511 = vst.msk [vmem:[%s118 + $0x30] sm:$0xff] %vm152, %v454
      %512 = vst.msk [vmem:[%s118 + $0x38] sm:$0xff] %vm152, %v456
      %513 = vst.msk [vmem:[%s118 + $0x40] sm:$0xff] %vm152, %v458
      %514 = vst.msk [vmem:[%s118 + $0x48] sm:$0xff] %vm152, %v460
      %515 = vst.msk [vmem:[%s118 + $0x50] sm:$0xff] %vm152, %v462
      %516 = vst.msk [vmem:[%s118 + $0x58] sm:$0xff] %vm152, %v464
      %517 = vst.msk [vmem:[%s118 + $0x60] sm:$0xff] %vm152, %v466
      %518 = vst.msk [vmem:[%s118 + $0x68] sm:$0xff] %vm152, %v468
      %519 = vst.msk [vmem:[%s118 + $0x70] sm:$0xff] %vm152, %v470
      %520 = vst.msk [vmem:[%s118 + $0x78] sm:$0xff] %vm152, %v472
      %521 = vst.msk [vmem:[%s118 + $0x80] sm:$0xff] %vm152, %v474
      %522 = vst.msk [vmem:[%s118 + $0x88] sm:$0xff] %vm152, %v476
      %523 = vst.msk [vmem:[%s118 + $0x90] sm:$0xff] %vm152, %v478
      %524 = vst.msk [vmem:[%s118 + $0x98] sm:$0xff] %vm152, %v480
      %525 = vst.msk [vmem:[%s118 + $0xa0] sm:$0xff] %vm152, %v482
      %526 = vst.msk [vmem:[%s118 + $0xa8] sm:$0xff] %vm152, %v484
      %527 = vst.msk [vmem:[%s118 + $0xb0] sm:$0xff] %vm152, %v486
      %528 = vst.msk [vmem:[%s118 + $0xb8] sm:$0xff] %vm152, %v488
      %529 = vst.msk [vmem:[%s118 + $0xc0] sm:$0xff] %vm152, %v490
      %530 = vst.msk [vmem:[%s118 + $0xc8] sm:$0xff] %vm152, %v492
      %531 = vst.msk [vmem:[%s118 + $0xd0] sm:$0xff] %vm152, %v494
      %532 = vst.msk [vmem:[%s118 + $0xd8] sm:$0xff] %vm152, %v496
      %533 = vst.msk [vmem:[%s118 + $0xe0] sm:$0xff] %vm152, %v498
      %534 = vst.msk [vmem:[%s118 + $0xe8] sm:$0xff] %vm152, %v500
      %535 = vst.msk [vmem:[%s118 + $0xf0] sm:$0xff] %vm152, %v502
      %536 = vst.msk [vmem:[%s118 + $0xf8] sm:$0xff] %vm152, %v504
      %s537 = smul.u32 32, %s12
      %p538 = scmp.lt.s32.totalorder %s537, 63
      %s539 = scalar_select %p538, %s537, 63
      %s540 = smul.addr %s539, 8
      %s541 = scalar_lea.vmem %s1, %s540
      // Predicated region
      $region25: #{tpu_custom_call.1} parent=23 // pred_check
        %p542 = pneg %p56
      $region26: #{tpu_custom_call.1} parent=23 // pred_check_branch
        %544 = sbr.rel (%p542) target = $region28
      $region27: #{tpu_custom_call.1} parent=23 // pred_region
        %s545 = smul.u32 32, %s12
      $region28: #{tpu_custom_call.1} parent=23 // pred_fallthru
        _
    $region24: #{tpu_custom_call.1} parent=5 // pred_fallthru
      _
    %p546 = scmp.le.s32.totalorder 2, %s7
    // Predicated region
    $region29: #{tpu_custom_call.1} parent=5 // pred_check
      %p547 = pneg %p546
    $region30: #{tpu_custom_call.1} parent=5 // pred_check_branch
      %549 = sbr.rel (%p547) target = $region32
    $region31: #{tpu_custom_call.1} parent=5 // pred_region
      %s550 = ssub.s32 %s7, 2
      // Predicated region
      $region33: #{tpu_custom_call.1} parent=31 // pred_check
        %p551 = pneg %p62
      $region34: #{tpu_custom_call.1} parent=31 // pred_check_branch
        %553 = sbr.rel (%p551) target = $region36
      $region35: #{tpu_custom_call.1} parent=31 // pred_region
        %s554 = smul.u32 32, %s13
        %p555 = scmp.lt.s32.totalorder %s554, 63
        %s556 = scalar_select %p555, %s554, 63
        %s557 = smul.addr %s556, 8
        %s558 = scalar_lea.vmem %s1, %s557
      $region36: #{tpu_custom_call.1} parent=31 // pred_fallthru
        _
    $region32: #{tpu_custom_call.1} parent=5 // pred_fallthru
      _
  $region6: #{tpu_custom_call.1} parent=0 // loop_footer
    %s11 = sadd.s32 1, %s7
  $region7: #{tpu_custom_call.1} parent=0 // loop_footer_branch
    %6 = sbr.rel target = $region3
  $region8: #{tpu_custom_call.1} parent=0 // loop_exit
    _

</llo_original>
